<compile_context>
chip_gen: v7x
topology: tpu7x:2x2x1
jax: 0.10.0
libtpu: 0.0.40
codegen_flags: <defaults>
</compile_context>

<pallas_src>
import jax
import jax.numpy as jnp
import numpy as np
from jax.experimental import pallas as pl
from jax.experimental.pallas import tpu as pltpu


def _round_up(n, m):
    return (n + m - 1) // m * m


def _min_grid_steps():
    """>=2 grid steps on dual-TensorCore chips so both cores get work."""
    try:
        kind = jax.devices()[0].device_kind.lower()
        if any(tag in kind for tag in ("v7", "7x", "v4", "v5p")):
            return 2
    except Exception:
        pass
    return 1


def ode_forward_kernel(dt_ref, x_ref, w1_ref, b1_ref, w2_ref, b2_ref,
                       wo_ref, bo_ref, out_ref):
    """One batch tile per grid step; all (lane-padded) params resident in VMEM.

    dt_ref:        SMEM f32[1]           (runtime scalar, no recompile per dt)
    x_ref:         VMEM bf16[tile, Fp]   (halved HBM stream; upcast on load)
    w1/w2_ref:     VMEM bf16[Fp, Fp]     (MXU inputs, single-buffered)
    wo_ref:        VMEM bf16[Fp, Cp]
    b1/b2/bo_ref:  VMEM f32[1, Fp/Cp]
    out_ref:       VMEM f32[tile, Cp]
    """
    dt = dt_ref[0]
    xb = x_ref[...]                      # bf16
    h = xb.astype(jnp.float32)           # f32 carry for the Euler updates

    # layer 1: explicit-Euler liquid update  h <- h + dt * tanh(h @ W1 + b1)
    pre = jnp.dot(xb, w1_ref[...],
                  preferred_element_type=jnp.float32) + b1_ref[...]
    h = h + dt * jnp.tanh(pre)

    # layer 2
    pre = jnp.dot(h.astype(jnp.bfloat16), w2_ref[...],
                  preferred_element_type=jnp.float32) + b2_ref[...]
    h = h + dt * jnp.tanh(pre)

    # output layer: plain linear -> logits (f32 accumulation)
    logits = jnp.dot(h.astype(jnp.bfloat16), wo_ref[...],
                     preferred_element_type=jnp.float32) + bo_ref[...]
    out_ref[...] = logits.astype(out_ref.dtype)


def ode_solver_forward(x, params, dt, *, max_batch_tile=1024):
    """Pallas wrapper: lane-dense padding, batch-only tiling, resident weights."""
    w1, b1, w2, b2, wo, bo = params
    B, F = x.shape
    H = w1.shape[1]
    C = wo.shape[1]
    # The residual liquid update requires hidden width == input width.
    assert w1.shape[0] == F and H == F
    assert w2.shape == (H, H) and wo.shape[0] == H

    LANE, SUBLANE = 128, 8
    Fp = _round_up(F, LANE)   # padded feature/hidden width (they coincide)
    Cp = _round_up(C, LANE)   # padded class width

    f32, bf16 = jnp.float32, jnp.bfloat16
    BF, F32 = 2, 4

    # --- VMEM budgeting -----------------------------------------------------
    # Resident (single-buffered) weights/biases.
    resident_bytes = (2 * Fp * Fp + Fp * Cp) * BF + (2 * Fp + Cp) * F32
    # Per-row buffer bytes: up to 3 bf16 x buffers + 2 f32 out buffers,
    # plus generous headroom for in-body f32 temps (h, pre) and bf16 casts.
    row_bytes = 3 * Fp * BF + 2 * Cp * F32 + 4 * Fp * F32
    VMEM_BUDGET = 32 << 20                      # fits v5e/v6e/v7x comfortably
    avail = max(VMEM_BUDGET - resident_bytes, row_bytes * SUBLANE)
    max_rows_fit = max((avail // row_bytes) // SUBLANE * SUBLANE, SUBLANE)
    max_tile = max(min(max_batch_tile, max_rows_fit), SUBLANE)

    # --- Balanced batch tiling ----------------------------------------------
    # Choose the number of tiles first, then the tile size, so padding waste
    # is < 8 rows per tile (instead of up to tile-1 rows).
    num_tiles = max(pl.cdiv(B, max_tile), _min_grid_steps())
    num_tiles = min(num_tiles, pl.cdiv(B, SUBLANE))   # no pure-padding tiles
    batch_tile = _round_up(pl.cdiv(B, num_tiles), SUBLANE)
    num_tiles = pl.cdiv(B, batch_tile)
    Bp = num_tiles * batch_tile

    # Explicit scoped-VMEM limit (scoped defaults are 16/32 MiB, far below
    # physical); generous slack, clamped safely below v7x's 64 MiB physical.
    needed = resident_bytes + batch_tile * row_bytes
    vmem_limit = int(min(max(needed * 3 // 2 + (2 << 20), 8 << 20), 48 << 20))

    # x input pipeline depth: 3-deep only when the grid is deep enough to use it.
    x_depth = 3 if num_tiles >= 3 else 2

    def pad2(a, rows, cols):
        a = a.astype(f32)
        return jnp.pad(a, ((0, rows - a.shape[0]), (0, cols - a.shape[1])))

    # Zero-padding: padded weight rows/cols and bias lanes are exactly 0, so
    # padded hidden lanes stay 0 through tanh and padded logits lanes are 0.
    xp = pad2(x, Bp, Fp).astype(bf16)          # bf16 activation stream
    w1p = pad2(w1, Fp, Fp).astype(bf16)        # bf16 MXU inputs
    w2p = pad2(w2, Fp, Fp).astype(bf16)
    wop = pad2(wo, Fp, Cp).astype(bf16)
    b1p = pad2(b1, 1, Fp)                      # f32 biases
    b2p = pad2(b2, 1, Fp)
    bop = pad2(bo, 1, Cp)
    dt_arr = jnp.asarray([dt], dtype=f32)      # runtime scalar via SMEM

    resident = pl.Buffered(1)                  # constant-index -> single buffer

    out = pl.pallas_call(
        ode_forward_kernel,
        out_shape=jax.ShapeDtypeStruct((Bp, Cp), f32),
        grid=(num_tiles,),
        in_specs=[
            pl.BlockSpec(memory_space=pltpu.MemorySpace.SMEM),     # dt scalar
            pl.BlockSpec((batch_tile, Fp), lambda i: (i, 0),
                         pipeline_mode=pl.Buffered(x_depth)),      # x tile
            pl.BlockSpec((Fp, Fp), lambda i: (0, 0),
                         pipeline_mode=resident),                  # W1
            pl.BlockSpec((1, Fp), lambda i: (0, 0),
                         pipeline_mode=resident),                  # b1
            pl.BlockSpec((Fp, Fp), lambda i: (0, 0),
                         pipeline_mode=resident),                  # W2
            pl.BlockSpec((1, Fp), lambda i: (0, 0),
                         pipeline_mode=resident),                  # b2
            pl.BlockSpec((Fp, Cp), lambda i: (0, 0),
                         pipeline_mode=resident),                  # Wout
            pl.BlockSpec((1, Cp), lambda i: (0, 0),
                         pipeline_mode=resident),                  # bout
        ],
        out_specs=pl.BlockSpec((batch_tile, Cp), lambda i: (i, 0)),
        compiler_params=pltpu.CompilerParams(
            dimension_semantics=("parallel",),
            vmem_limit_bytes=vmem_limit),
    )(dt_arr, xp, w1p, b1p, w2p, b2p, wop, bop)

    return out[:B, :C].astype(x.dtype)


def reference_forward_bf16(x, params, dt):
    """Pure-JAX reference matching the kernel's precision policy
    (bf16 x stream, bf16 MXU inputs, f32 accumulation, f32 elementwise)."""
    w1, b1, w2, b2, wo, bo = params
    bf = lambda a: a.astype(jnp.bfloat16)
    xb = bf(x)
    h = xb.astype(jnp.float32)
    h = h + dt * jnp.tanh(
        jnp.dot(xb, bf(w1), preferred_element_type=jnp.float32) + b1)
    h = h + dt * jnp.tanh(
        jnp.dot(bf(h), bf(w2), preferred_element_type=jnp.float32) + b2)
    return jnp.dot(bf(h), bf(wo), preferred_element_type=jnp.float32) + bo


def reference_forward_f32(x, params, dt):
    """Full-f32 reference mirroring the original ODESolver.forward semantics."""
    w1, b1, w2, b2, wo, bo = params
    h = x.astype(jnp.float32)
    h = h + dt * jnp.tanh(h @ w1 + b1)          # model.layers[0]
    h = h + dt * jnp.tanh(h @ w2 + b2)          # model.layers[1]
    return h @ wo + bo                          # model.output_layer


def make_params(key, in_features, hidden, num_classes):
    k1, k2, k3, k4, k5, k6 = jax.random.split(key, 6)
    scale = 0.1
    w1 = scale * jax.random.normal(k1, (in_features, hidden), jnp.float32)
    b1 = scale * jax.random.normal(k2, (1, hidden), jnp.float32)
    w2 = scale * jax.random.normal(k3, (hidden, hidden), jnp.float32)
    b2 = scale * jax.random.normal(k4, (1, hidden), jnp.float32)
    wo = scale * jax.random.normal(k5, (hidden, num_classes), jnp.float32)
    bo = scale * jax.random.normal(k6, (1, num_classes), jnp.float32)
    return (w1, b1, w2, b2, wo, bo)


if __name__ == "__main__":
    # Small shapes consistent with the module's forward (batched feature vectors).
    batch, in_features, hidden, num_classes = 16, 32, 32, 16
    dt = 0.1

    key = jax.random.PRNGKey(0)
    kx, kp = jax.random.split(key)
    x = jax.random.normal(kx, (batch, in_features), jnp.float32)
    params = make_params(kp, in_features, hidden, num_classes)

    out = jax.block_until_ready(ode_solver_forward(x, params, dt))

    # Exactness check against a reference with the same precision policy.
    ref = reference_forward_bf16(x, params, dt)
    np.testing.assert_allclose(np.asarray(out), np.asarray(ref),
                               rtol=2e-3, atol=2e-3)

    # Semantic check against the original full-f32 module math (bf16 inputs on
    # the MXU introduce only ~1e-3-level differences at these scales).
    ref32 = reference_forward_f32(x, params, dt)
    np.testing.assert_allclose(np.asarray(out), np.asarray(ref32),
                               rtol=5e-2, atol=5e-2)

    # TODO(synk): ODESolver.loss (cross_entropy) and the torch.enable_grad()
    # autograd context are training-time concerns, not part of the forward
    # hot path; they are intentionally not lowered to Pallas.
    print("KERNEL_OK")
</pallas_src>

<mosaic_0001>
module attributes {stable_mosaic.version = 11 : i64} {
  func.func @ode_forward_kernel(%arg0: i32, %arg1: memref<1xf32, #tpu.memory_space<smem>>, %arg2: memref<16x128xbf16, #tpu.memory_space<vmem>>, %arg3: memref<128x128xbf16, #tpu.memory_space<vmem>>, %arg4: memref<1x128xf32, #tpu.memory_space<vmem>>, %arg5: memref<128x128xbf16, #tpu.memory_space<vmem>>, %arg6: memref<1x128xf32, #tpu.memory_space<vmem>>, %arg7: memref<128x128xbf16, #tpu.memory_space<vmem>>, %arg8: memref<1x128xf32, #tpu.memory_space<vmem>>, %arg9: memref<16x128xf32, #tpu.memory_space<vmem>>) attributes {dimension_semantics = [#tpu.dimension_semantics<parallel>], iteration_bounds = array<i64: 1>, scalar_prefetch = 0 : i64, scratch_operands = 0 : i64, tpu.core_type = #tpu.core_type<tc>, window_params = [{transform_indices = @transform_0, window_bounds = array<i64: 1>}, {pipeline_mode = #tpu.pipeline_mode<double_buffered>, transform_indices = @transform_1, window_bounds = array<i64: 16, 128>}, {pipeline_mode = #tpu.pipeline_mode<synchronous>, transform_indices = @transform_2, window_bounds = array<i64: 128, 128>}, {pipeline_mode = #tpu.pipeline_mode<synchronous>, transform_indices = @transform_3, window_bounds = array<i64: 1, 128>}, {pipeline_mode = #tpu.pipeline_mode<synchronous>, transform_indices = @transform_4, window_bounds = array<i64: 128, 128>}, {pipeline_mode = #tpu.pipeline_mode<synchronous>, transform_indices = @transform_5, window_bounds = array<i64: 1, 128>}, {pipeline_mode = #tpu.pipeline_mode<synchronous>, transform_indices = @transform_6, window_bounds = array<i64: 128, 128>}, {pipeline_mode = #tpu.pipeline_mode<synchronous>, transform_indices = @transform_7, window_bounds = array<i64: 1, 128>}, {transform_indices = @transform_8, window_bounds = array<i64: 16, 128>}]} {
    %c0 = arith.constant 0 : index
    %0 = memref.load %arg1[%c0] : memref<1xf32, #tpu.memory_space<smem>>
    %c0_0 = arith.constant 0 : index
    %c0_1 = arith.constant 0 : index
    %1 = vector.load %arg2[%c0_0, %c0_1] : memref<16x128xbf16, #tpu.memory_space<vmem>>, vector<16x128xbf16>
    %2 = arith.extf %1 : vector<16x128xbf16> to vector<16x128xf32>
    %c0_2 = arith.constant 0 : index
    %c0_3 = arith.constant 0 : index
    %3 = vector.load %arg3[%c0_2, %c0_3] : memref<128x128xbf16, #tpu.memory_space<vmem>>, vector<128x128xbf16>
    %cst = arith.constant dense<0.000000e+00> : vector<16x128xf32>
    %4 = tpu.matmul %1, %3, %cst {dimension_numbers = #tpu.dot_dimension_numbers<[1], [0], [0], [1], [0, 0, 1, 1], [], []>} : vector<16x128xbf16>, vector<128x128xbf16>, vector<16x128xf32> -> vector<16x128xf32>
    %c0_4 = arith.constant 0 : index
    %c0_5 = arith.constant 0 : index
    %5 = vector.load %arg4[%c0_4, %c0_5] : memref<1x128xf32, #tpu.memory_space<vmem>>, vector<1x128xf32>
    %6 = vector.broadcast %5 : vector<1x128xf32> to vector<16x128xf32>
    %7 = arith.addf %4, %6 : vector<16x128xf32>
    %8 = math.tanh %7 : vector<16x128xf32>
    %9 = vector.broadcast %0 : f32 to vector<16x128xf32>
    %10 = arith.mulf %9, %8 : vector<16x128xf32>
    %11 = arith.addf %2, %10 : vector<16x128xf32>
    %12 = arith.truncf %11 : vector<16x128xf32> to vector<16x128xbf16>
    %c0_6 = arith.constant 0 : index
    %c0_7 = arith.constant 0 : index
    %13 = vector.load %arg5[%c0_6, %c0_7] : memref<128x128xbf16, #tpu.memory_space<vmem>>, vector<128x128xbf16>
    %cst_8 = arith.constant dense<0.000000e+00> : vector<16x128xf32>
    %14 = tpu.matmul %12, %13, %cst_8 {dimension_numbers = #tpu.dot_dimension_numbers<[1], [0], [0], [1], [0, 0, 1, 1], [], []>} : vector<16x128xbf16>, vector<128x128xbf16>, vector<16x128xf32> -> vector<16x128xf32>
    %c0_9 = arith.constant 0 : index
    %c0_10 = arith.constant 0 : index
    %15 = vector.load %arg6[%c0_9, %c0_10] : memref<1x128xf32, #tpu.memory_space<vmem>>, vector<1x128xf32>
    %16 = vector.broadcast %15 : vector<1x128xf32> to vector<16x128xf32>
    %17 = arith.addf %14, %16 : vector<16x128xf32>
    %18 = math.tanh %17 : vector<16x128xf32>
    %19 = vector.broadcast %0 : f32 to vector<16x128xf32>
    %20 = arith.mulf %19, %18 : vector<16x128xf32>
    %21 = arith.addf %11, %20 : vector<16x128xf32>
    %22 = arith.truncf %21 : vector<16x128xf32> to vector<16x128xbf16>
    %c0_11 = arith.constant 0 : index
    %c0_12 = arith.constant 0 : index
    %23 = vector.load %arg7[%c0_11, %c0_12] : memref<128x128xbf16, #tpu.memory_space<vmem>>, vector<128x128xbf16>
    %cst_13 = arith.constant dense<0.000000e+00> : vector<16x128xf32>
    %24 = tpu.matmul %22, %23, %cst_13 {dimension_numbers = #tpu.dot_dimension_numbers<[1], [0], [0], [1], [0, 0, 1, 1], [], []>} : vector<16x128xbf16>, vector<128x128xbf16>, vector<16x128xf32> -> vector<16x128xf32>
    %c0_14 = arith.constant 0 : index
    %c0_15 = arith.constant 0 : index
    %25 = vector.load %arg8[%c0_14, %c0_15] : memref<1x128xf32, #tpu.memory_space<vmem>>, vector<1x128xf32>
    %26 = vector.broadcast %25 : vector<1x128xf32> to vector<16x128xf32>
    %27 = arith.addf %24, %26 : vector<16x128xf32>
    %c0_16 = arith.constant 0 : index
    %c0_17 = arith.constant 0 : index
    %28 = vector.load %arg9[%c0_16, %c0_17] : memref<16x128xf32, #tpu.memory_space<vmem>>, vector<16x128xf32>
    tpu.vector_store %arg9[%c0_16, %c0_17], %27 {strides = array<i32>} : memref<16x128xf32, #tpu.memory_space<vmem>>, vector<16x128xf32>,
    return
  }
  func.func @transform_0(%arg0: i32) -> i32 {
    %c0_i32 = arith.constant 0 : i32
    %c0_i32_0 = arith.constant 0 : i32
    return %c0_i32 : i32
  }
  func.func @transform_1(%arg0: i32) -> (i32, i32) {
    %c0_i32 = arith.constant 0 : i32
    %c0_i32_0 = arith.constant 0 : i32
    return %arg0, %c0_i32 : i32, i32
  }
  func.func @transform_2(%arg0: i32) -> (i32, i32) {
    %c0_i32 = arith.constant 0 : i32
    %c0_i32_0 = arith.constant 0 : i32
    %c0_i32_1 = arith.constant 0 : i32
    return %c0_i32, %c0_i32_0 : i32, i32
  }
  func.func @transform_3(%arg0: i32) -> (i32, i32) {
    %c0_i32 = arith.constant 0 : i32
    %c0_i32_0 = arith.constant 0 : i32
    %c0_i32_1 = arith.constant 0 : i32
    return %c0_i32, %c0_i32_0 : i32, i32
  }
  func.func @transform_4(%arg0: i32) -> (i32, i32) {
    %c0_i32 = arith.constant 0 : i32
    %c0_i32_0 = arith.constant 0 : i32
    %c0_i32_1 = arith.constant 0 : i32
    return %c0_i32, %c0_i32_0 : i32, i32
  }
  func.func @transform_5(%arg0: i32) -> (i32, i32) {
    %c0_i32 = arith.constant 0 : i32
    %c0_i32_0 = arith.constant 0 : i32
    %c0_i32_1 = arith.constant 0 : i32
    return %c0_i32, %c0_i32_0 : i32, i32
  }
  func.func @transform_6(%arg0: i32) -> (i32, i32) {
    %c0_i32 = arith.constant 0 : i32
    %c0_i32_0 = arith.constant 0 : i32
    %c0_i32_1 = arith.constant 0 : i32
    return %c0_i32, %c0_i32_0 : i32, i32
  }
  func.func @transform_7(%arg0: i32) -> (i32, i32) {
    %c0_i32 = arith.constant 0 : i32
    %c0_i32_0 = arith.constant 0 : i32
    %c0_i32_1 = arith.constant 0 : i32
    return %c0_i32, %c0_i32_0 : i32, i32
  }
  func.func @transform_8(%arg0: i32) -> (i32, i32) {
    %c0_i32 = arith.constant 0 : i32
    %c0_i32_0 = arith.constant 0 : i32
    return %arg0, %c0_i32 : i32, i32
  }
}

</mosaic_0001>

<llo_original>
// kernel: tpu_custom_call.1
$region0: #{tpu_custom_call.1}
  #allocation0 [shape = 'u32[]', space=smem, size = 0x4, offset = 0x4, fixed_abs, tag = 'smem constant byte address 0x4 - core index']
  #allocation1 [shape = 'u32[144,128]{1,0:T(1,128)}', space=vmem, size = 0x12000, scoped, tag = 'internal scratch']
  #allocation2 [shape = 'f32[1]{0:T(128)S(6)}', space=smem, size = 0x200, scoped, tag = 'scoped memory for tpu_custom_call.1']
  %s0 = inlined_call_operand.<no memory space> [shape: f32[1], index: 0, kind: input, shape index: {}]
  %s1 = inlined_call_operand.hbm [shape: bf16[16,128], index: 1, kind: input, shape index: {}]
  %s2 = inlined_call_operand.hbm [shape: bf16[128,128], index: 2, kind: input, shape index: {}]
  %s3 = inlined_call_operand.vmem [shape: f32[1,128], index: 3, kind: input, shape index: {}]
  %s4 = inlined_call_operand.hbm [shape: bf16[128,128], index: 4, kind: input, shape index: {}]
  %s5 = inlined_call_operand.vmem [shape: f32[1,128], index: 5, kind: input, shape index: {}]
  %s6 = inlined_call_operand.hbm [shape: bf16[128,128], index: 6, kind: input, shape index: {}]
  %s7 = inlined_call_operand.vmem [shape: f32[1,128], index: 7, kind: input, shape index: {}]
  %s8 = inlined_call_operand.hbm [shape: f32[16,128], index: 8, kind: output, shape index: {}]
  %s9 = sld [smem:[#allocation0]]
  $region58: #{tpu_custom_call.1} parent=0
    _
  %s11 = ssub.s32 1, %s9
  %s12 = scalar_select 0, %s11, %s9
  %13 = sst [smem:[#allocation2]] %s0
  $region1: #{tpu_custom_call.1} parent=0
    #allocation3 [shape = 'u8[4096]{0}', space=vmem, size = 0x1000, scoped, tag = 'input window, operand 1, single buffered']
    #allocation4 [shape = 's32[1]{0}', space=sflag, size = 0x4, scoped, tag = 'scoped memory for tpu_custom_call.1']
    #allocation5 [shape = 's32[1]{0}', space=sflag, size = 0x4, scoped, tag = 'scoped memory for tpu_custom_call.1']
    #allocation6 [shape = 'u8[32768]{0}', space=vmem, size = 0x8000, scoped, tag = 'input window, operand 2, single buffered']
    #allocation7 [shape = 's32[1]{0}', space=sflag, size = 0x4, scoped, tag = 'scoped memory for tpu_custom_call.1']
    #allocation8 [shape = 'u8[32768]{0}', space=vmem, size = 0x8000, scoped, tag = 'input window, operand 4, single buffered']
    #allocation9 [shape = 'u8[32768]{0}', space=vmem, size = 0x8000, scoped, tag = 'input window, operand 6, single buffered']
    #allocation10 [shape = 's32[1]{0}', space=sflag, size = 0x4, scoped, tag = 'scoped memory for tpu_custom_call.1']
    #allocation11 [shape = 'u8[8192]{0}', space=vmem, size = 0x2000, scoped, tag = 'output window, operand 0, single buffered']
    %14 = vsyncpa [#allocation4], 0
    %15 = vsyncpa [#allocation7], 0
    %16 = vsyncpa [#allocation10], 0
    %17 = vsyncpa [#allocation5], 0
    // Predicated region
    $region2: #{tpu_custom_call.1} parent=1 // pred_check
      _
    $region3: #{tpu_custom_call.1} parent=1 // pred_check_branch
      %19 = sbr.rel (0) target = $region5
    $region4: #{tpu_custom_call.1} parent=1 // pred_region
      _
    $region5: #{tpu_custom_call.1} parent=1 // pred_fallthru
      _
    // Predicated region
    $region6: #{tpu_custom_call.1} parent=1 // pred_check
      _
    $region7: #{tpu_custom_call.1} parent=1 // pred_check_branch
      %21 = sbr.rel (0) target = $region9
    $region8: #{tpu_custom_call.1} parent=1 // pred_region
      %s23 = ssub.s32 128, 128
      %24 = vsyncadd [#allocation4], %s23
      %s25 = sshll.u32 [#allocation3], 4
      %s26 = int_to_ptr.vmem [resolvable:$true] %s25
      %31 = dma.hbm_to_vmem [thread:$0]  %s1, 128, %s26, [#allocation4], 64, 64, 4
    $region9: #{tpu_custom_call.1} parent=1 // pred_fallthru
      _
    // Predicated region
    $region10: #{tpu_custom_call.1} parent=1 // pred_check
      _
    $region11: #{tpu_custom_call.1} parent=1 // pred_check_branch
      %33 = sbr.rel (0) target = $region13
    $region12: #{tpu_custom_call.1} parent=1 // pred_region
      %s35 = ssub.s32 1024, 1024
      %36 = vsyncadd [#allocation7], %s35
      %s37 = sshll.u32 [#allocation6], 4
      %s38 = int_to_ptr.vmem [resolvable:$true] %s37
      %43 = dma.hbm_to_vmem [thread:$0]  %s2, 1024, %s38, [#allocation7], 64, 64, 4
    $region13: #{tpu_custom_call.1} parent=1 // pred_fallthru
      _
    // Predicated region
    $region14: #{tpu_custom_call.1} parent=1 // pred_check
      _
    $region15: #{tpu_custom_call.1} parent=1 // pred_check_branch
      %45 = sbr.rel (0) target = $region17
    $region16: #{tpu_custom_call.1} parent=1 // pred_region
      _
    $region17: #{tpu_custom_call.1} parent=1 // pred_fallthru
      _
    // Predicated region
    $region18: #{tpu_custom_call.1} parent=1 // pred_check
      _
    $region19: #{tpu_custom_call.1} parent=1 // pred_check_branch
      %47 = sbr.rel (0) target = $region21
    $region20: #{tpu_custom_call.1} parent=1 // pred_region
      %s49 = ssub.s32 1024, 1024
      %50 = vsyncadd [#allocation7], %s49
      %s51 = sshll.u32 [#allocation8], 4
      %s52 = int_to_ptr.vmem [resolvable:$true] %s51
      %57 = dma.hbm_to_vmem [thread:$0]  %s4, 1024, %s52, [#allocation7], 64, 64, 4
    $region21: #{tpu_custom_call.1} parent=1 // pred_fallthru
      _
    // Predicated region
    $region22: #{tpu_custom_call.1} parent=1 // pred_check
      _
    $region23: #{tpu_custom_call.1} parent=1 // pred_check_branch
      %59 = sbr.rel (0) target = $region25
    $region24: #{tpu_custom_call.1} parent=1 // pred_region
      _
    $region25: #{tpu_custom_call.1} parent=1 // pred_fallthru
      _
    // Predicated region
    $region26: #{tpu_custom_call.1} parent=1 // pred_check
      _
    $region27: #{tpu_custom_call.1} parent=1 // pred_check_branch
      %61 = sbr.rel (0) target = $region29
    $region28: #{tpu_custom_call.1} parent=1 // pred_region
      %s63 = ssub.s32 1024, 1024
      %64 = vsyncadd [#allocation10], %s63
      %s65 = sshll.u32 [#allocation9], 4
      %s66 = int_to_ptr.vmem [resolvable:$true] %s65
      %71 = dma.hbm_to_vmem [thread:$0]  %s6, 1024, %s66, [#allocation10], 64, 64, 4
    $region29: #{tpu_custom_call.1} parent=1 // pred_fallthru
      _
    // Predicated region
    $region30: #{tpu_custom_call.1} parent=1 // pred_check
      _
    $region31: #{tpu_custom_call.1} parent=1 // pred_check_branch
      %73 = sbr.rel (0) target = $region33
    $region32: #{tpu_custom_call.1} parent=1 // pred_region
      _
    $region33: #{tpu_custom_call.1} parent=1 // pred_fallthru
      _
    // Predicated region
    $region34: #{tpu_custom_call.1} parent=1 // pred_check
      _
    $region35: #{tpu_custom_call.1} parent=1 // pred_check_branch
      %75 = sbr.rel (0) target = $region37
    $region36: #{tpu_custom_call.1} parent=1 // pred_region
      %76 = dma.done [#allocation4], 128
    $region37: #{tpu_custom_call.1} parent=1 // pred_fallthru
      _
    // Predicated region
    $region38: #{tpu_custom_call.1} parent=1 // pred_check
      _
    $region39: #{tpu_custom_call.1} parent=1 // pred_check_branch
      %78 = sbr.rel (0) target = $region41
    $region40: #{tpu_custom_call.1} parent=1 // pred_region
      %79 = dma.done [#allocation7], 1024
    $region41: #{tpu_custom_call.1} parent=1 // pred_fallthru
      _
    // Predicated region
    $region42: #{tpu_custom_call.1} parent=1 // pred_check
      _
    $region43: #{tpu_custom_call.1} parent=1 // pred_check_branch
      %81 = sbr.rel (0) target = $region45
    $region44: #{tpu_custom_call.1} parent=1 // pred_region
      %82 = dma.done [#allocation7], 1024
    $region45: #{tpu_custom_call.1} parent=1 // pred_fallthru
      _
    // Predicated region
    $region46: #{tpu_custom_call.1} parent=1 // pred_check
      _
    $region47: #{tpu_custom_call.1} parent=1 // pred_check_branch
      %84 = sbr.rel (0) target = $region49
    $region48: #{tpu_custom_call.1} parent=1 // pred_region
      %85 = dma.done [#allocation10], 1024
    $region49: #{tpu_custom_call.1} parent=1 // pred_fallthru
      _
    %s87 = sld [smem:[#allocation2]]
    %v88 = vld [vmem:[#allocation3] sm:$0xf]
    %v89 = vld [vmem:[#allocation3 + $0x4] sm:$0xf]
    %v90 = vunpack.c.l.bf16 %v88
    %v91 = vunpack.c.l.bf16 %v89
    %v92 = vld [vmem:[#allocation6] sm:$0xf]
    %v93 = vld [vmem:[#allocation6 + $0x4] sm:$0xf]
    %v94 = vld [vmem:[#allocation6 + $0x8] sm:$0xf]
    %v95 = vld [vmem:[#allocation6 + $0xc] sm:$0xf]
    %v96 = vld [vmem:[#allocation6 + $0x10] sm:$0xf]
    %v97 = vld [vmem:[#allocation6 + $0x14] sm:$0xf]
    %v98 = vld [vmem:[#allocation6 + $0x18] sm:$0xf]
    %v99 = vld [vmem:[#allocation6 + $0x1c] sm:$0xf]
    %v100 = vld [vmem:[#allocation6 + $0x20] sm:$0xf]
    %v101 = vld [vmem:[#allocation6 + $0x24] sm:$0xf]
    %v102 = vld [vmem:[#allocation6 + $0x28] sm:$0xf]
    %v103 = vld [vmem:[#allocation6 + $0x2c] sm:$0xf]
    %v104 = vld [vmem:[#allocation6 + $0x30] sm:$0xf]
    %v105 = vld [vmem:[#allocation6 + $0x34] sm:$0xf]
    %v106 = vld [vmem:[#allocation6 + $0x38] sm:$0xf]
    %v107 = vld [vmem:[#allocation6 + $0x3c] sm:$0xf]
    %v108 = vld [vmem:[%s3] sm:$0x1]
    %v110 = vlaneseq
    %v111 = vshrl.u32 %v110, 7
    %v112 = vsub.s32 0, %v111
    %v113 = vrot.slane %v108, %v112
    %v117 = vunpack.c.l.b16 %v88
    %v118 = vunpack.c.l.b16 %v89
    %v119 = vpack.c.b16 %v118, %v117
    %v137 = vunpack.c.l.b16 %v92
    %v138 = vunpack.c.l.b16 %v93
    %v139 = vunpack.c.l.b16 %v94
    %v140 = vunpack.c.l.b16 %v95
    %v141 = vunpack.c.l.b16 %v96
    %v142 = vunpack.c.l.b16 %v97
    %v143 = vunpack.c.l.b16 %v98
    %v144 = vunpack.c.l.b16 %v99
    %v145 = vunpack.c.l.b16 %v100
    %v146 = vunpack.c.l.b16 %v101
    %v147 = vunpack.c.l.b16 %v102
    %v148 = vunpack.c.l.b16 %v103
    %v149 = vunpack.c.l.b16 %v104
    %v150 = vunpack.c.l.b16 %v105
    %v151 = vunpack.c.l.b16 %v106
    %v152 = vunpack.c.l.b16 %v107
    %v153 = vpack.c.b16 %v138, %v137
    %v154 = vpack.c.b16 %v140, %v139
    %v155 = vpack.c.b16 %v142, %v141
    %v156 = vpack.c.b16 %v144, %v143
    %v157 = vpack.c.b16 %v146, %v145
    %v158 = vpack.c.b16 %v148, %v147
    %v159 = vpack.c.b16 %v150, %v149
    %v160 = vpack.c.b16 %v152, %v151
    %169 = vmatprep.subr.bf16.mxu0 0
    %170 = vmatpush1.bf16.msra.mxu0 %v153
    %171 = vmatprep.subr.bf16.mxu0 0
    %172 = vmatpush1.bf16.msra.mxu0 %v154
    %173 = vmatprep.subr.bf16.mxu0 0
    %174 = vmatpush1.bf16.msra.mxu0 %v155
    %175 = vmatprep.subr.bf16.mxu0 0
    %176 = vmatpush1.bf16.msra.mxu0 %v156
    %177 = vmatprep.subr.bf16.mxu0 0
    %178 = vmatpush1.bf16.msra.mxu0 %v157
    %179 = vmatprep.subr.bf16.mxu0 0
    %180 = vmatpush1.bf16.msra.mxu0 %v158
    %181 = vmatprep.subr.bf16.mxu0 0
    %182 = vmatpush1.bf16.msra.mxu0 %v159
    %183 = vmatprep.subr.bf16.mxu0 0
    %184 = vmatpush1.bf16.msra.mxu0 %v160
    %185 = vmatprep.subr.bf16.mxu0 0
    %186 = vmatpush1.bf16.msra.mxu0 0
    %187 = vmatprep.subr.bf16.mxu0 0
    %188 = vmatpush1.bf16.msra.mxu0 0
    %189 = vmatprep.subr.bf16.mxu0 0
    %190 = vmatpush1.bf16.msra.mxu0 0
    %191 = vmatprep.subr.bf16.mxu0 0
    %192 = vmatpush1.bf16.msra.mxu0 0
    %193 = vmatprep.subr.bf16.mxu0 0
    %194 = vmatpush1.bf16.msra.mxu0 0
    %195 = vmatprep.subr.bf16.mxu0 0
    %196 = vmatpush1.bf16.msra.mxu0 0
    %197 = vmatprep.subr.bf16.mxu0 0
    %198 = vmatpush1.bf16.msra.mxu0 0
    %199 = vmatprep.subr.bf16.mxu0 0
    %200 = vmatpush1.bf16.msra.mxu0 0
    %201 = vmatprep.mubr.bf16.mxu0 0
    %202 = vmatmul.mubr.bf16.gmra.mrb[0].mxu0 %v119
    %v203 = vpop.f32.mrb[0].mxu0
    %v204 = vadd.f32 %v113, %v203
    %v205 = vpop.f32.mrb[0].mxu0
    %v206 = vpop.f32.mrb[0].mxu0
    %v207 = vadd.f32 %v113, %v206
    %v208 = vpop.f32.mrb[0].mxu0
    %209 = vdwg.mxu0
    %v210 = vtanh.pop %v204
    %v211 = vtanh.pop %v207
    %v212 = vstv %s87
    %v213 = vmul.f32 %v212, %v210
    %v214 = vmul.f32 %v212, %v211
    %v215 = vadd.f32 %v90, %v213
    %v216 = vadd.f32 %v91, %v214
    %v217 = vpack.c.bf16 %v216, %v215
    %v218 = vld [vmem:[#allocation8] sm:$0xf]
    %v219 = vld [vmem:[#allocation8 + $0x4] sm:$0xf]
    %v220 = vld [vmem:[#allocation8 + $0x8] sm:$0xf]
    %v221 = vld [vmem:[#allocation8 + $0xc] sm:$0xf]
    %v222 = vld [vmem:[#allocation8 + $0x10] sm:$0xf]
    %v223 = vld [vmem:[#allocation8 + $0x14] sm:$0xf]
    %v224 = vld [vmem:[#allocation8 + $0x18] sm:$0xf]
    %v225 = vld [vmem:[#allocation8 + $0x1c] sm:$0xf]
    %v226 = vld [vmem:[#allocation8 + $0x20] sm:$0xf]
    %v227 = vld [vmem:[#allocation8 + $0x24] sm:$0xf]
    %v228 = vld [vmem:[#allocation8 + $0x28] sm:$0xf]
    %v229 = vld [vmem:[#allocation8 + $0x2c] sm:$0xf]
    %v230 = vld [vmem:[#allocation8 + $0x30] sm:$0xf]
    %v231 = vld [vmem:[#allocation8 + $0x34] sm:$0xf]
    %v232 = vld [vmem:[#allocation8 + $0x38] sm:$0xf]
    %v233 = vld [vmem:[#allocation8 + $0x3c] sm:$0xf]
    %v234 = vld [vmem:[%s5] sm:$0x1]
    %v236 = vlaneseq
    %v237 = vshrl.u32 %v236, 7
    %v238 = vsub.s32 0, %v237
    %v239 = vrot.slane %v234, %v238
    %v257 = vunpack.c.l.b16 %v218
    %v258 = vunpack.c.l.b16 %v219
    %v259 = vunpack.c.l.b16 %v220
    %v260 = vunpack.c.l.b16 %v221
    %v261 = vunpack.c.l.b16 %v222
    %v262 = vunpack.c.l.b16 %v223
    %v263 = vunpack.c.l.b16 %v224
    %v264 = vunpack.c.l.b16 %v225
    %v265 = vunpack.c.l.b16 %v226
    %v266 = vunpack.c.l.b16 %v227
    %v267 = vunpack.c.l.b16 %v228
    %v268 = vunpack.c.l.b16 %v229
    %v269 = vunpack.c.l.b16 %v230
    %v270 = vunpack.c.l.b16 %v231
    %v271 = vunpack.c.l.b16 %v232
    %v272 = vunpack.c.l.b16 %v233
    %v273 = vpack.c.b16 %v258, %v257
    %v274 = vpack.c.b16 %v260, %v259
    %v275 = vpack.c.b16 %v262, %v261
    %v276 = vpack.c.b16 %v264, %v263
    %v277 = vpack.c.b16 %v266, %v265
    %v278 = vpack.c.b16 %v268, %v267
    %v279 = vpack.c.b16 %v270, %v269
    %v280 = vpack.c.b16 %v272, %v271
    %289 = vmatprep.subr.bf16.mxu0 0
    %290 = vmatpush1.bf16.msra.mxu0 %v273
    %291 = vmatprep.subr.bf16.mxu0 0
    %292 = vmatpush1.bf16.msra.mxu0 %v274
    %293 = vmatprep.subr.bf16.mxu0 0
    %294 = vmatpush1.bf16.msra.mxu0 %v275
    %295 = vmatprep.subr.bf16.mxu0 0
    %296 = vmatpush1.bf16.msra.mxu0 %v276
    %297 = vmatprep.subr.bf16.mxu0 0
    %298 = vmatpush1.bf16.msra.mxu0 %v277
    %299 = vmatprep.subr.bf16.mxu0 0
    %300 = vmatpush1.bf16.msra.mxu0 %v278
    %301 = vmatprep.subr.bf16.mxu0 0
    %302 = vmatpush1.bf16.msra.mxu0 %v279
    %303 = vmatprep.subr.bf16.mxu0 0
    %304 = vmatpush1.bf16.msra.mxu0 %v280
    %305 = vmatprep.subr.bf16.mxu0 0
    %306 = vmatpush1.bf16.msra.mxu0 0
    %307 = vmatprep.subr.bf16.mxu0 0
    %308 = vmatpush1.bf16.msra.mxu0 0
    %309 = vmatprep.subr.bf16.mxu0 0
    %310 = vmatpush1.bf16.msra.mxu0 0
    %311 = vmatprep.subr.bf16.mxu0 0
    %312 = vmatpush1.bf16.msra.mxu0 0
    %313 = vmatprep.subr.bf16.mxu0 0
    %314 = vmatpush1.bf16.msra.mxu0 0
    %315 = vmatprep.subr.bf16.mxu0 0
    %316 = vmatpush1.bf16.msra.mxu0 0
    %317 = vmatprep.subr.bf16.mxu0 0
    %318 = vmatpush1.bf16.msra.mxu0 0
    %319 = vmatprep.subr.bf16.mxu0 0
    %320 = vmatpush1.bf16.msra.mxu0 0
    %321 = vmatprep.mubr.bf16.mxu0 0
    %322 = vmatmul.mubr.bf16.gmra.mrb[0].mxu0 %v217
    %v323 = vpop.f32.mrb[0].mxu0
    %v324 = vadd.f32 %v239, %v323
    %v325 = vpop.f32.mrb[0].mxu0
    %v326 = vpop.f32.mrb[0].mxu0
    %v327 = vadd.f32 %v239, %v326
    %v328 = vpop.f32.mrb[0].mxu0
    %329 = vdwg.mxu0
    %v330 = vtanh.pop %v324
    %v331 = vtanh.pop %v327
    %v332 = vmul.f32 %v212, %v330
    %v333 = vmul.f32 %v212, %v331
    %v334 = vadd.f32 %v215, %v332
    %v335 = vadd.f32 %v216, %v333
    %v336 = vpack.c.bf16 %v335, %v334
    %v337 = vld [vmem:[#allocation9] sm:$0xf]
    %v338 = vld [vmem:[#allocation9 + $0x4] sm:$0xf]
    %v339 = vld [vmem:[#allocation9 + $0x8] sm:$0xf]
    %v340 = vld [vmem:[#allocation9 + $0xc] sm:$0xf]
    %v341 = vld [vmem:[#allocation9 + $0x10] sm:$0xf]
    %v342 = vld [vmem:[#allocation9 + $0x14] sm:$0xf]
    %v343 = vld [vmem:[#allocation9 + $0x18] sm:$0xf]
    %v344 = vld [vmem:[#allocation9 + $0x1c] sm:$0xf]
    %v345 = vld [vmem:[#allocation9 + $0x20] sm:$0xf]
    %v346 = vld [vmem:[#allocation9 + $0x24] sm:$0xf]
    %v347 = vld [vmem:[#allocation9 + $0x28] sm:$0xf]
    %v348 = vld [vmem:[#allocation9 + $0x2c] sm:$0xf]
    %v349 = vld [vmem:[#allocation9 + $0x30] sm:$0xf]
    %v350 = vld [vmem:[#allocation9 + $0x34] sm:$0xf]
    %v351 = vld [vmem:[#allocation9 + $0x38] sm:$0xf]
    %v352 = vld [vmem:[#allocation9 + $0x3c] sm:$0xf]
    %v353 = vld [vmem:[%s7] sm:$0x1]
    %v355 = vlaneseq
    %v356 = vshrl.u32 %v355, 7
    %v357 = vsub.s32 0, %v356
    %v358 = vrot.slane %v353, %v357
    %v376 = vunpack.c.l.b16 %v337
    %v377 = vunpack.c.l.b16 %v338
    %v378 = vunpack.c.l.b16 %v339
    %v379 = vunpack.c.l.b16 %v340
    %v380 = vunpack.c.l.b16 %v341
    %v381 = vunpack.c.l.b16 %v342
    %v382 = vunpack.c.l.b16 %v343
    %v383 = vunpack.c.l.b16 %v344
    %v384 = vunpack.c.l.b16 %v345
    %v385 = vunpack.c.l.b16 %v346
    %v386 = vunpack.c.l.b16 %v347
    %v387 = vunpack.c.l.b16 %v348
    %v388 = vunpack.c.l.b16 %v349
    %v389 = vunpack.c.l.b16 %v350
    %v390 = vunpack.c.l.b16 %v351
    %v391 = vunpack.c.l.b16 %v352
    %v392 = vpack.c.b16 %v377, %v376
    %v393 = vpack.c.b16 %v379, %v378
    %v394 = vpack.c.b16 %v381, %v380
    %v395 = vpack.c.b16 %v383, %v382
    %v396 = vpack.c.b16 %v385, %v384
    %v397 = vpack.c.b16 %v387, %v386
    %v398 = vpack.c.b16 %v389, %v388
    %v399 = vpack.c.b16 %v391, %v390
    %408 = vmatprep.subr.bf16.mxu0 0
    %409 = vmatpush1.bf16.msra.mxu0 %v392
    %410 = vmatprep.subr.bf16.mxu0 0
    %411 = vmatpush1.bf16.msra.mxu0 %v393
    %412 = vmatprep.subr.bf16.mxu0 0
    %413 = vmatpush1.bf16.msra.mxu0 %v394
    %414 = vmatprep.subr.bf16.mxu0 0
    %415 = vmatpush1.bf16.msra.mxu0 %v395
    %416 = vmatprep.subr.bf16.mxu0 0
    %417 = vmatpush1.bf16.msra.mxu0 %v396
    %418 = vmatprep.subr.bf16.mxu0 0
    %419 = vmatpush1.bf16.msra.mxu0 %v397
    %420 = vmatprep.subr.bf16.mxu0 0
    %421 = vmatpush1.bf16.msra.mxu0 %v398
    %422 = vmatprep.subr.bf16.mxu0 0
    %423 = vmatpush1.bf16.msra.mxu0 %v399
    %424 = vmatprep.subr.bf16.mxu0 0
    %425 = vmatpush1.bf16.msra.mxu0 0
    %426 = vmatprep.subr.bf16.mxu0 0
    %427 = vmatpush1.bf16.msra.mxu0 0
    %428 = vmatprep.subr.bf16.mxu0 0
    %429 = vmatpush1.bf16.msra.mxu0 0
    %430 = vmatprep.subr.bf16.mxu0 0
    %431 = vmatpush1.bf16.msra.mxu0 0
    %432 = vmatprep.subr.bf16.mxu0 0
    %433 = vmatpush1.bf16.msra.mxu0 0
    %434 = vmatprep.subr.bf16.mxu0 0
    %435 = vmatpush1.bf16.msra.mxu0 0
    %436 = vmatprep.subr.bf16.mxu0 0
    %437 = vmatpush1.bf16.msra.mxu0 0
    %438 = vmatprep.subr.bf16.mxu0 0
    %439 = vmatpush1.bf16.msra.mxu0 0
    %440 = vmatprep.mubr.bf16.mxu0 0
    %441 = vmatmul.mubr.bf16.gmra.mrb[0].mxu0 %v336
    %v442 = vpop.f32.mrb[0].mxu0
    %v443 = vadd.f32 %v358, %v442
    %v444 = vpop.f32.mrb[0].mxu0
    %v445 = vpop.f32.mrb[0].mxu0
    %v446 = vadd.f32 %v358, %v445
    %v447 = vpop.f32.mrb[0].mxu0
    %448 = vdwg.mxu0
    %449 = vst [vmem:[#allocation11] sm:$0xff] %v443
    %450 = vst [vmem:[#allocation11 + $0x8] sm:$0xff] %v446
    // Predicated region
    $region50: #{tpu_custom_call.1} parent=1 // pred_check
      _
    $region51: #{tpu_custom_call.1} parent=1 // pred_check_branch
      %452 = sbr.rel (0) target = $region53
    $region52: #{tpu_custom_call.1} parent=1 // pred_region
      %s454 = ssub.s32 256, 256
      %455 = vsyncadd [#allocation5], %s454
      %s456 = sshll.u32 [#allocation11], 4
      %s457 = int_to_ptr.vmem [resolvable:$true] %s456
      %462 = dma.vmem_to_hbm [thread:$0]  %s457, 256, %s8, [#allocation5], 128, 128, 8
    $region53: #{tpu_custom_call.1} parent=1 // pred_fallthru
      _
    // Predicated region
    $region54: #{tpu_custom_call.1} parent=1 // pred_check
      _
    $region55: #{tpu_custom_call.1} parent=1 // pred_check_branch
      %464 = sbr.rel (0) target = $region57
    $region56: #{tpu_custom_call.1} parent=1 // pred_region
      %465 = dma.done [#allocation5], 256
    $region57: #{tpu_custom_call.1} parent=1 // pred_fallthru
      _
    %466 = vsyncpa [#allocation4], 1
    %467 = vsyncpa [#allocation7], 1
    %468 = vsyncpa [#allocation10], 1
    %469 = vsyncpa [#allocation5], 1

</llo_original>
